<compile_context>
chip_gen: v7x
topology: tpu7x:2x2x1
jax: 0.10.0
libtpu: 0.0.40
codegen_flags: <defaults>
</compile_context>

<pallas_src>
import jax
import jax.numpy as jnp
from jax.experimental import pallas as pl
from jax.experimental.pallas import tpu as pltpu

NUM_CLASSES = 50
OUT_PAD = 128          # lane-dense padded class dim
NEG_BIG = -1e30        # padded-class bias -> exp underflows to exactly 0


# ------------------------------------------------------------------ kernel --
def byte_fusion_kernel(
    vd_ref, wd_ref,                         # batch-sliced inputs (bf16)
    vw1_ref, vb1_ref, vw2_ref, vb2_ref,     # vision network params
    ww1_ref, wb1_ref, ww2_ref, wb2_ref,     # weight network params (ww1 padded)
    fw1v_ref, fw1w_ref, fb1_ref,            # fusion Linear(192->128), split
    fw2_ref, fb2_ref,                       # fusion Linear(128->50), padded to 128
    out_ref,
):
    f32 = jnp.float32
    bf16 = jnp.bfloat16

    # ----- vision network: Linear(128,256) ReLU [Dropout] Linear(256,128) ReLU
    vd = vd_ref[...]
    vh = jnp.dot(vd, vw1_ref[...], preferred_element_type=f32) + vb1_ref[...]
    vh = jnp.maximum(vh, 0.0).astype(bf16)
    vf = jnp.dot(vh, vw2_ref[...], preferred_element_type=f32) + vb2_ref[...]
    vf = jnp.maximum(vf, 0.0).astype(bf16)            # (TB, 128)

    # ----- weight network: Linear(16,64) ReLU [Dropout] Linear(64,64) ReLU
    # (input / first weight K-dim zero-padded 16 -> 128; extra rows contribute 0)
    wd = wd_ref[...]
    wh = jnp.dot(wd, ww1_ref[...], preferred_element_type=f32) + wb1_ref[...]
    wh = jnp.maximum(wh, 0.0).astype(bf16)
    wf = jnp.dot(wh, ww2_ref[...], preferred_element_type=f32) + wb2_ref[...]
    wf = jnp.maximum(wf, 0.0).astype(bf16)            # (TB, 64)

    # ----- fusion: Linear(192,128) on concat([vf, wf]) == vf@Wv + wf@Ww + b
    fh = (jnp.dot(vf, fw1v_ref[...], preferred_element_type=f32)
          + jnp.dot(wf, fw1w_ref[...], preferred_element_type=f32)
          + fb1_ref[...])
    fh = jnp.maximum(fh, 0.0).astype(bf16)            # (TB, 128)

    # Linear(128, 50) padded to 128 output lanes; padded lanes get bias -1e30.
    logits = jnp.dot(fh, fw2_ref[...], preferred_element_type=f32) + fb2_ref[...]

    # ----- Softmax over the class dim (padded lanes exp() to exactly 0)
    m = jnp.max(logits, axis=1, keepdims=True)
    e = jnp.exp(logits - m)
    inv = pl.reciprocal(jnp.sum(e, axis=1, keepdims=True), approx=True)
    out_ref[...] = e * inv


# ----------------------------------------------------------------- wrapper --
def _round_up(x, m):
    return ((x + m - 1) // m) * m


def byte_fusion_forward(vision_data, weight_data, kp, *, tb=256):
    """kp = kernel-ready params from prepare_kernel_params()."""
    B = vision_data.shape[0]
    tb = min(tb, _round_up(B, 8))       # batch tile (multiple of 8 sublanes)
    b_pad = _round_up(B, tb)
    grid = (b_pad // tb,)

    # Pad batch to a tile multiple; pad weight_data's 16-wide K dim to 128 lanes.
    vd = jnp.pad(vision_data, ((0, b_pad - B), (0, 0))).astype(jnp.bfloat16)
    wd = jnp.pad(
        weight_data, ((0, b_pad - B), (0, 128 - weight_data.shape[1]))
    ).astype(jnp.bfloat16)

    args = (
        vd, wd,
        kp["vw1"], kp["vb1"], kp["vw2"], kp["vb2"],
        kp["ww1"], kp["wb1"], kp["ww2"], kp["wb2"],
        kp["fw1v"], kp["fw1w"], kp["fb1"],
        kp["fw2"], kp["fb2"],
    )

    in_specs = [
        pl.BlockSpec((tb, 128), lambda i: (i, 0)),     # vision batch tile
        pl.BlockSpec((tb, 128), lambda i: (i, 0)),     # weight batch tile
    ] + [
        pl.BlockSpec(a.shape, lambda i: (0, 0))        # params: VMEM-resident
        for a in args[2:]
    ]

    flops_per_row = 2 * (128 * 256 + 256 * 128 + 128 * 64 + 64 * 64
                         + 128 * 128 + 64 * 128 + 128 * 128)
    param_bytes = sum(int(a.size) * a.dtype.itemsize for a in args[2:])
    bytes_accessed = (int(vd.size) * 2 + int(wd.size) * 2
                      + b_pad * OUT_PAD * 4 + param_bytes)

    out = pl.pallas_call(
        byte_fusion_kernel,
        out_shape=jax.ShapeDtypeStruct((b_pad, OUT_PAD), jnp.float32),
        grid=grid,
        in_specs=in_specs,
        out_specs=pl.BlockSpec((tb, OUT_PAD), lambda i: (i, 0)),
        compiler_params=pltpu.CompilerParams(
            dimension_semantics=("parallel",)),
        cost_estimate=pl.CostEstimate(
            flops=b_pad * flops_per_row,
            transcendentals=b_pad * OUT_PAD,
            bytes_accessed=int(bytes_accessed)),
    )(*args)

    return out[:B, :NUM_CLASSES]


# --------------------------------------------------------- parameter setup --
def _linear_params(key, fan_in, fan_out):
    """PyTorch-style uniform init, weight stored transposed as (in, out)."""
    kw, kb = jax.random.split(key)
    bound = 1.0 / jnp.sqrt(jnp.float32(fan_in))
    w = jax.random.uniform(kw, (fan_in, fan_out), jnp.float32, -bound, bound)
    b = jax.random.uniform(kb, (1, fan_out), jnp.float32, -bound, bound)
    return w, b


def init_params(key):
    keys = jax.random.split(key, 6)
    vw1, vb1 = _linear_params(keys[0], 128, 256)
    vw2, vb2 = _linear_params(keys[1], 256, 128)
    ww1, wb1 = _linear_params(keys[2], 16, 64)
    ww2, wb2 = _linear_params(keys[3], 64, 64)
    fw1, fb1 = _linear_params(keys[4], 128 + 64, 128)   # (192, 128)
    fw2, fb2 = _linear_params(keys[5], 128, 50)
    return {
        "vw1": vw1, "vb1": vb1, "vw2": vw2, "vb2": vb2,
        "ww1": ww1, "wb1": wb1, "ww2": ww2, "wb2": wb2,
        # split the 192-row fusion weight: rows 0:128 -> vision, 128:192 -> weight
        "fw1v": fw1[:128], "fw1w": fw1[128:], "fb1": fb1,
        "fw2": fw2, "fb2": fb2,
    }


def prepare_kernel_params(p):
    """Cast matmul weights to bf16, pad ww1 K-dim to 128 and class dim to 128."""
    bf16 = jnp.bfloat16
    ww1_pad = jnp.pad(p["ww1"], ((0, 128 - p["ww1"].shape[0]), (0, 0)))
    fw2_pad = jnp.pad(p["fw2"], ((0, 0), (0, OUT_PAD - p["fw2"].shape[1])))
    fb2_pad = jnp.pad(p["fb2"], ((0, 0), (0, OUT_PAD - p["fb2"].shape[1])),
                      constant_values=NEG_BIG)
    return {
        "vw1": p["vw1"].astype(bf16), "vb1": p["vb1"],
        "vw2": p["vw2"].astype(bf16), "vb2": p["vb2"],
        "ww1": ww1_pad.astype(bf16),  "wb1": p["wb1"],
        "ww2": p["ww2"].astype(bf16), "wb2": p["wb2"],
        "fw1v": p["fw1v"].astype(bf16), "fw1w": p["fw1w"].astype(bf16),
        "fb1": p["fb1"],
        "fw2": fw2_pad.astype(bf16), "fb2": fb2_pad,
    }


# ------------------------------------------------------- pure-JAX reference --
def reference_forward(vision_data, weight_data, p):
    vh = jnp.maximum(vision_data @ p["vw1"] + p["vb1"], 0.0)
    vf = jnp.maximum(vh @ p["vw2"] + p["vb2"], 0.0)
    wh = jnp.maximum(weight_data @ p["ww1"] + p["wb1"], 0.0)
    wf = jnp.maximum(wh @ p["ww2"] + p["wb2"], 0.0)
    combined = jnp.concatenate([vf, wf], axis=1)
    fw1 = jnp.concatenate([p["fw1v"], p["fw1w"]], axis=0)
    fh = jnp.maximum(combined @ fw1 + p["fb1"], 0.0)
    logits = fh @ p["fw2"] + p["fb2"]
    return jax.nn.softmax(logits, axis=1)


if __name__ == "__main__":
    key = jax.random.PRNGKey(0)
    k_params, k_data = jax.random.split(key)

    params = init_params(k_params)
    kparams = prepare_kernel_params(params)

    # Small case (single grid step) and a larger case exercising batch tiling,
    # batch padding and the multi-step parallel grid.
    for B in (8, 384):
        kv, kw = jax.random.split(jax.random.fold_in(k_data, B))
        vision_data = jax.random.normal(kv, (B, 128), jnp.float32)
        weight_data = jax.random.normal(kw, (B, 16), jnp.float32)

        out = jax.block_until_ready(
            byte_fusion_forward(vision_data, weight_data, kparams))
        ref = reference_forward(vision_data, weight_data, params)

        assert out.shape == (B, NUM_CLASSES)
        # approx reciprocal -> rows sum to 1 only approximately
        assert jnp.allclose(jnp.sum(out, axis=1), 1.0, atol=1e-2)
        # bf16 MXU inputs -> looser tolerance vs the f32 reference
        assert jnp.allclose(out, ref, atol=5e-2, rtol=5e-2)

    print("KERNEL_OK")
</pallas_src>

<mosaic_0001>
module attributes {stable_mosaic.version = 11 : i64} {
  func.func @byte_fusion_kernel(%arg0: i32, %arg1: memref<8x128xbf16, #tpu.memory_space<vmem>>, %arg2: memref<8x128xbf16, #tpu.memory_space<vmem>>, %arg3: memref<128x256xbf16, #tpu.memory_space<vmem>>, %arg4: memref<1x256xf32, #tpu.memory_space<vmem>>, %arg5: memref<256x128xbf16, #tpu.memory_space<vmem>>, %arg6: memref<1x128xf32, #tpu.memory_space<vmem>>, %arg7: memref<128x64xbf16, #tpu.memory_space<vmem>>, %arg8: memref<1x64xf32, #tpu.memory_space<vmem>>, %arg9: memref<64x64xbf16, #tpu.memory_space<vmem>>, %arg10: memref<1x64xf32, #tpu.memory_space<vmem>>, %arg11: memref<128x128xbf16, #tpu.memory_space<vmem>>, %arg12: memref<64x128xbf16, #tpu.memory_space<vmem>>, %arg13: memref<1x128xf32, #tpu.memory_space<vmem>>, %arg14: memref<128x128xbf16, #tpu.memory_space<vmem>>, %arg15: memref<1x128xf32, #tpu.memory_space<vmem>>, %arg16: memref<8x128xf32, #tpu.memory_space<vmem>>) attributes {dimension_semantics = [#tpu.dimension_semantics<parallel>], iteration_bounds = array<i64: 1>, scalar_prefetch = 0 : i64, scratch_operands = 0 : i64, tpu.core_type = #tpu.core_type<tc>, window_params = [{transform_indices = @transform_0, window_bounds = array<i64: 8, 128>}, {transform_indices = @transform_1, window_bounds = array<i64: 8, 128>}, {pipeline_mode = #tpu.pipeline_mode<synchronous>, transform_indices = @transform_2, window_bounds = array<i64: 128, 256>}, {pipeline_mode = #tpu.pipeline_mode<synchronous>, transform_indices = @transform_3, window_bounds = array<i64: 1, 256>}, {pipeline_mode = #tpu.pipeline_mode<synchronous>, transform_indices = @transform_4, window_bounds = array<i64: 256, 128>}, {pipeline_mode = #tpu.pipeline_mode<synchronous>, transform_indices = @transform_5, window_bounds = array<i64: 1, 128>}, {pipeline_mode = #tpu.pipeline_mode<synchronous>, transform_indices = @transform_6, window_bounds = array<i64: 128, 64>}, {pipeline_mode = #tpu.pipeline_mode<synchronous>, transform_indices = @transform_7, window_bounds = array<i64: 1, 64>}, {pipeline_mode = #tpu.pipeline_mode<synchronous>, transform_indices = @transform_8, window_bounds = array<i64: 64, 64>}, {pipeline_mode = #tpu.pipeline_mode<synchronous>, transform_indices = @transform_9, window_bounds = array<i64: 1, 64>}, {pipeline_mode = #tpu.pipeline_mode<synchronous>, transform_indices = @transform_10, window_bounds = array<i64: 128, 128>}, {pipeline_mode = #tpu.pipeline_mode<synchronous>, transform_indices = @transform_11, window_bounds = array<i64: 64, 128>}, {pipeline_mode = #tpu.pipeline_mode<synchronous>, transform_indices = @transform_12, window_bounds = array<i64: 1, 128>}, {pipeline_mode = #tpu.pipeline_mode<synchronous>, transform_indices = @transform_13, window_bounds = array<i64: 128, 128>}, {pipeline_mode = #tpu.pipeline_mode<synchronous>, transform_indices = @transform_14, window_bounds = array<i64: 1, 128>}, {transform_indices = @transform_15, window_bounds = array<i64: 8, 128>}]} {
    %c0 = arith.constant 0 : index
    %c0_0 = arith.constant 0 : index
    %0 = vector.load %arg1[%c0, %c0_0] : memref<8x128xbf16, #tpu.memory_space<vmem>>, vector<8x128xbf16>
    %c0_1 = arith.constant 0 : index
    %c0_2 = arith.constant 0 : index
    %1 = vector.load %arg3[%c0_1, %c0_2] : memref<128x256xbf16, #tpu.memory_space<vmem>>, vector<128x256xbf16>
    %cst = arith.constant dense<0.000000e+00> : vector<8x256xf32>
    %2 = tpu.matmul %0, %1, %cst {dimension_numbers = #tpu.dot_dimension_numbers<[1], [0], [0], [1], [0, 0, 1, 1], [], []>} : vector<8x128xbf16>, vector<128x256xbf16>, vector<8x256xf32> -> vector<8x256xf32>
    %c0_3 = arith.constant 0 : index
    %c0_4 = arith.constant 0 : index
    %3 = vector.load %arg4[%c0_3, %c0_4] : memref<1x256xf32, #tpu.memory_space<vmem>>, vector<1x256xf32>
    %4 = vector.broadcast %3 : vector<1x256xf32> to vector<8x256xf32>
    %5 = arith.addf %2, %4 : vector<8x256xf32>
    %cst_5 = arith.constant 0.000000e+00 : f32
    %6 = vector.broadcast %cst_5 : f32 to vector<8x256xf32>
    %7 = arith.maximumf %5, %6 : vector<8x256xf32>
    %8 = arith.truncf %7 : vector<8x256xf32> to vector<8x256xbf16>
    %c0_6 = arith.constant 0 : index
    %c0_7 = arith.constant 0 : index
    %9 = vector.load %arg5[%c0_6, %c0_7] : memref<256x128xbf16, #tpu.memory_space<vmem>>, vector<256x128xbf16>
    %cst_8 = arith.constant dense<0.000000e+00> : vector<8x128xf32>
    %10 = tpu.matmul %8, %9, %cst_8 {dimension_numbers = #tpu.dot_dimension_numbers<[1], [0], [0], [1], [0, 0, 1, 1], [], []>} : vector<8x256xbf16>, vector<256x128xbf16>, vector<8x128xf32> -> vector<8x128xf32>
    %c0_9 = arith.constant 0 : index
    %c0_10 = arith.constant 0 : index
    %11 = vector.load %arg6[%c0_9, %c0_10] : memref<1x128xf32, #tpu.memory_space<vmem>>, vector<1x128xf32>
    %12 = vector.broadcast %11 : vector<1x128xf32> to vector<8x128xf32>
    %13 = arith.addf %10, %12 : vector<8x128xf32>
    %cst_11 = arith.constant 0.000000e+00 : f32
    %14 = vector.broadcast %cst_11 : f32 to vector<8x128xf32>
    %15 = arith.maximumf %13, %14 : vector<8x128xf32>
    %16 = arith.truncf %15 : vector<8x128xf32> to vector<8x128xbf16>
    %c0_12 = arith.constant 0 : index
    %c0_13 = arith.constant 0 : index
    %17 = vector.load %arg2[%c0_12, %c0_13] : memref<8x128xbf16, #tpu.memory_space<vmem>>, vector<8x128xbf16>
    %c0_14 = arith.constant 0 : index
    %c0_15 = arith.constant 0 : index
    %18 = vector.load %arg7[%c0_14, %c0_15] : memref<128x64xbf16, #tpu.memory_space<vmem>>, vector<128x64xbf16>
    %cst_16 = arith.constant dense<0.000000e+00> : vector<8x64xf32>
    %19 = tpu.matmul %17, %18, %cst_16 {dimension_numbers = #tpu.dot_dimension_numbers<[1], [0], [0], [1], [0, 0, 1, 1], [], []>} : vector<8x128xbf16>, vector<128x64xbf16>, vector<8x64xf32> -> vector<8x64xf32>
    %c0_17 = arith.constant 0 : index
    %c0_18 = arith.constant 0 : index
    %20 = vector.load %arg8[%c0_17, %c0_18] : memref<1x64xf32, #tpu.memory_space<vmem>>, vector<1x64xf32>
    %21 = vector.broadcast %20 : vector<1x64xf32> to vector<8x64xf32>
    %22 = arith.addf %19, %21 : vector<8x64xf32>
    %cst_19 = arith.constant 0.000000e+00 : f32
    %23 = vector.broadcast %cst_19 : f32 to vector<8x64xf32>
    %24 = arith.maximumf %22, %23 : vector<8x64xf32>
    %25 = arith.truncf %24 : vector<8x64xf32> to vector<8x64xbf16>
    %c0_20 = arith.constant 0 : index
    %c0_21 = arith.constant 0 : index
    %26 = vector.load %arg9[%c0_20, %c0_21] : memref<64x64xbf16, #tpu.memory_space<vmem>>, vector<64x64xbf16>
    %cst_22 = arith.constant dense<0.000000e+00> : vector<8x64xf32>
    %27 = tpu.matmul %25, %26, %cst_22 {dimension_numbers = #tpu.dot_dimension_numbers<[1], [0], [0], [1], [0, 0, 1, 1], [], []>} : vector<8x64xbf16>, vector<64x64xbf16>, vector<8x64xf32> -> vector<8x64xf32>
    %c0_23 = arith.constant 0 : index
    %c0_24 = arith.constant 0 : index
    %28 = vector.load %arg10[%c0_23, %c0_24] : memref<1x64xf32, #tpu.memory_space<vmem>>, vector<1x64xf32>
    %29 = vector.broadcast %28 : vector<1x64xf32> to vector<8x64xf32>
    %30 = arith.addf %27, %29 : vector<8x64xf32>
    %cst_25 = arith.constant 0.000000e+00 : f32
    %31 = vector.broadcast %cst_25 : f32 to vector<8x64xf32>
    %32 = arith.maximumf %30, %31 : vector<8x64xf32>
    %33 = arith.truncf %32 : vector<8x64xf32> to vector<8x64xbf16>
    %c0_26 = arith.constant 0 : index
    %c0_27 = arith.constant 0 : index
    %34 = vector.load %arg11[%c0_26, %c0_27] : memref<128x128xbf16, #tpu.memory_space<vmem>>, vector<128x128xbf16>
    %cst_28 = arith.constant dense<0.000000e+00> : vector<8x128xf32>
    %35 = tpu.matmul %16, %34, %cst_28 {dimension_numbers = #tpu.dot_dimension_numbers<[1], [0], [0], [1], [0, 0, 1, 1], [], []>} : vector<8x128xbf16>, vector<128x128xbf16>, vector<8x128xf32> -> vector<8x128xf32>
    %c0_29 = arith.constant 0 : index
    %c0_30 = arith.constant 0 : index
    %36 = vector.load %arg12[%c0_29, %c0_30] : memref<64x128xbf16, #tpu.memory_space<vmem>>, vector<64x128xbf16>
    %cst_31 = arith.constant dense<0.000000e+00> : vector<8x128xf32>
    %37 = tpu.matmul %33, %36, %cst_31 {dimension_numbers = #tpu.dot_dimension_numbers<[1], [0], [0], [1], [0, 0, 1, 1], [], []>} : vector<8x64xbf16>, vector<64x128xbf16>, vector<8x128xf32> -> vector<8x128xf32>
    %38 = arith.addf %35, %37 : vector<8x128xf32>
    %c0_32 = arith.constant 0 : index
    %c0_33 = arith.constant 0 : index
    %39 = vector.load %arg13[%c0_32, %c0_33] : memref<1x128xf32, #tpu.memory_space<vmem>>, vector<1x128xf32>
    %40 = vector.broadcast %39 : vector<1x128xf32> to vector<8x128xf32>
    %41 = arith.addf %38, %40 : vector<8x128xf32>
    %cst_34 = arith.constant 0.000000e+00 : f32
    %42 = vector.broadcast %cst_34 : f32 to vector<8x128xf32>
    %43 = arith.maximumf %41, %42 : vector<8x128xf32>
    %44 = arith.truncf %43 : vector<8x128xf32> to vector<8x128xbf16>
    %c0_35 = arith.constant 0 : index
    %c0_36 = arith.constant 0 : index
    %45 = vector.load %arg14[%c0_35, %c0_36] : memref<128x128xbf16, #tpu.memory_space<vmem>>, vector<128x128xbf16>
    %cst_37 = arith.constant dense<0.000000e+00> : vector<8x128xf32>
    %46 = tpu.matmul %44, %45, %cst_37 {dimension_numbers = #tpu.dot_dimension_numbers<[1], [0], [0], [1], [0, 0, 1, 1], [], []>} : vector<8x128xbf16>, vector<128x128xbf16>, vector<8x128xf32> -> vector<8x128xf32>
    %c0_38 = arith.constant 0 : index
    %c0_39 = arith.constant 0 : index
    %47 = vector.load %arg15[%c0_38, %c0_39] : memref<1x128xf32, #tpu.memory_space<vmem>>, vector<1x128xf32>
    %48 = vector.broadcast %47 : vector<1x128xf32> to vector<8x128xf32>
    %49 = arith.addf %46, %48 : vector<8x128xf32>
    %cst_40 = arith.constant dense<0xFF800000> : vector<8xf32>
    %50 = vector.multi_reduction <maximumf>, %49, %cst_40 [1] : vector<8x128xf32> to vector<8xf32>
    %51 = vector.shape_cast %50 : vector<8xf32> to vector<8x1xf32>
    %52 = vector.broadcast %51 : vector<8x1xf32> to vector<8x128xf32>
    %53 = arith.subf %49, %52 : vector<8x128xf32>
    %54 = math.exp %53 : vector<8x128xf32>
    %cst_41 = arith.constant dense<0.000000e+00> : vector<8xf32>
    %55 = vector.multi_reduction <add>, %54, %cst_41 [1] : vector<8x128xf32> to vector<8xf32>
    %56 = vector.shape_cast %55 : vector<8xf32> to vector<8x1xf32>
    %57 = tpu.reciprocal %56 {approx = true} : vector<8x1xf32> -> vector<8x1xf32>
    %58 = vector.broadcast %57 : vector<8x1xf32> to vector<8x128xf32>
    %59 = arith.mulf %54, %58 : vector<8x128xf32>
    %c0_42 = arith.constant 0 : index
    %c0_43 = arith.constant 0 : index
    %60 = vector.load %arg16[%c0_42, %c0_43] : memref<8x128xf32, #tpu.memory_space<vmem>>, vector<8x128xf32>
    tpu.vector_store %arg16[%c0_42, %c0_43], %59 {strides = array<i32>} : memref<8x128xf32, #tpu.memory_space<vmem>>, vector<8x128xf32>,
    return
  }
  func.func @transform_0(%arg0: i32) -> (i32, i32) {
    %c0_i32 = arith.constant 0 : i32
    %c0_i32_0 = arith.constant 0 : i32
    return %arg0, %c0_i32 : i32, i32
  }
  func.func @transform_1(%arg0: i32) -> (i32, i32) {
    %c0_i32 = arith.constant 0 : i32
    %c0_i32_0 = arith.constant 0 : i32
    return %arg0, %c0_i32 : i32, i32
  }
  func.func @transform_2(%arg0: i32) -> (i32, i32) {
    %c0_i32 = arith.constant 0 : i32
    %c0_i32_0 = arith.constant 0 : i32
    %c0_i32_1 = arith.constant 0 : i32
    return %c0_i32, %c0_i32_0 : i32, i32
  }
  func.func @transform_3(%arg0: i32) -> (i32, i32) {
    %c0_i32 = arith.constant 0 : i32
    %c0_i32_0 = arith.constant 0 : i32
    %c0_i32_1 = arith.constant 0 : i32
    return %c0_i32, %c0_i32_0 : i32, i32
  }
  func.func @transform_4(%arg0: i32) -> (i32, i32) {
    %c0_i32 = arith.constant 0 : i32
    %c0_i32_0 = arith.constant 0 : i32
    %c0_i32_1 = arith.constant 0 : i32
    return %c0_i32, %c0_i32_0 : i32, i32
  }
  func.func @transform_5(%arg0: i32) -> (i32, i32) {
    %c0_i32 = arith.constant 0 : i32
    %c0_i32_0 = arith.constant 0 : i32
    %c0_i32_1 = arith.constant 0 : i32
    return %c0_i32, %c0_i32_0 : i32, i32
  }
  func.func @transform_6(%arg0: i32) -> (i32, i32) {
    %c0_i32 = arith.constant 0 : i32
    %c0_i32_0 = arith.constant 0 : i32
    %c0_i32_1 = arith.constant 0 : i32
    return %c0_i32, %c0_i32_0 : i32, i32
  }
  func.func @transform_7(%arg0: i32) -> (i32, i32) {
    %c0_i32 = arith.constant 0 : i32
    %c0_i32_0 = arith.constant 0 : i32
    %c0_i32_1 = arith.constant 0 : i32
    return %c0_i32, %c0_i32_0 : i32, i32
  }
  func.func @transform_8(%arg0: i32) -> (i32, i32) {
    %c0_i32 = arith.constant 0 : i32
    %c0_i32_0 = arith.constant 0 : i32
    %c0_i32_1 = arith.constant 0 : i32
    return %c0_i32, %c0_i32_0 : i32, i32
  }
  func.func @transform_9(%arg0: i32) -> (i32, i32) {
    %c0_i32 = arith.constant 0 : i32
    %c0_i32_0 = arith.constant 0 : i32
    %c0_i32_1 = arith.constant 0 : i32
    return %c0_i32, %c0_i32_0 : i32, i32
  }
  func.func @transform_10(%arg0: i32) -> (i32, i32) {
    %c0_i32 = arith.constant 0 : i32
    %c0_i32_0 = arith.constant 0 : i32
    %c0_i32_1 = arith.constant 0 : i32
    return %c0_i32, %c0_i32_0 : i32, i32
  }
  func.func @transform_11(%arg0: i32) -> (i32, i32) {
    %c0_i32 = arith.constant 0 : i32
    %c0_i32_0 = arith.constant 0 : i32
    %c0_i32_1 = arith.constant 0 : i32
    return %c0_i32, %c0_i32_0 : i32, i32
  }
  func.func @transform_12(%arg0: i32) -> (i32, i32) {
    %c0_i32 = arith.constant 0 : i32
    %c0_i32_0 = arith.constant 0 : i32
    %c0_i32_1 = arith.constant 0 : i32
    return %c0_i32, %c0_i32_0 : i32, i32
  }
  func.func @transform_13(%arg0: i32) -> (i32, i32) {
    %c0_i32 = arith.constant 0 : i32
    %c0_i32_0 = arith.constant 0 : i32
    %c0_i32_1 = arith.constant 0 : i32
    return %c0_i32, %c0_i32_0 : i32, i32
  }
  func.func @transform_14(%arg0: i32) -> (i32, i32) {
    %c0_i32 = arith.constant 0 : i32
    %c0_i32_0 = arith.constant 0 : i32
    %c0_i32_1 = arith.constant 0 : i32
    return %c0_i32, %c0_i32_0 : i32, i32
  }
  func.func @transform_15(%arg0: i32) -> (i32, i32) {
    %c0_i32 = arith.constant 0 : i32
    %c0_i32_0 = arith.constant 0 : i32
    return %arg0, %c0_i32 : i32, i32
  }
}

</mosaic_0001>

<llo_original>
// kernel: tpu_custom_call.1
$region0: #{tpu_custom_call.1}
  #allocation0 [shape = 'u32[]', space=smem, size = 0x4, offset = 0x4, fixed_abs, tag = 'smem constant byte address 0x4 - core index']
  #allocation1 [shape = 'u32[144,128]{1,0:T(1,128)}', space=vmem, size = 0x12000, scoped, tag = 'internal scratch']
  %s0 = inlined_call_operand.hbm [shape: bf16[8,128], index: 0, kind: input, shape index: {}]
  %s1 = inlined_call_operand.hbm [shape: bf16[8,128], index: 1, kind: input, shape index: {}]
  %s2 = inlined_call_operand.hbm [shape: bf16[128,256], index: 2, kind: input, shape index: {}]
  %s3 = inlined_call_operand.vmem [shape: f32[1,256], index: 3, kind: input, shape index: {}]
  %s4 = inlined_call_operand.hbm [shape: bf16[256,128], index: 4, kind: input, shape index: {}]
  %s5 = inlined_call_operand.hbm [shape: f32[1,128], index: 5, kind: input, shape index: {}]
  %s6 = inlined_call_operand.vmem [shape: bf16[128,64], index: 6, kind: input, shape index: {}]
  %s7 = inlined_call_operand.hbm [shape: f32[1,64], index: 7, kind: input, shape index: {}]
  %s8 = inlined_call_operand.hbm [shape: bf16[64,64], index: 8, kind: input, shape index: {}]
  %s9 = inlined_call_operand.hbm [shape: f32[1,64], index: 9, kind: input, shape index: {}]
  %s10 = inlined_call_operand.vmem [shape: bf16[128,128], index: 10, kind: input, shape index: {}]
  %s11 = inlined_call_operand.hbm [shape: bf16[64,128], index: 11, kind: input, shape index: {}]
  %s12 = inlined_call_operand.vmem [shape: f32[1,128], index: 12, kind: input, shape index: {}]
  %s13 = inlined_call_operand.vmem [shape: bf16[128,128], index: 13, kind: input, shape index: {}]
  %s14 = inlined_call_operand.vmem [shape: f32[1,128], index: 14, kind: input, shape index: {}]
  %s15 = inlined_call_operand.hbm [shape: f32[8,128], index: 15, kind: output, shape index: {}]
  %s16 = sld [smem:[#allocation0]]
  $region106: #{tpu_custom_call.1} parent=0
    _
  %s18 = ssub.s32 1, %s16
  %s19 = scalar_select 0, %s18, %s16
  $region1: #{tpu_custom_call.1} parent=0
    #allocation2 [shape = 'u8[2048]{0}', space=vmem, size = 0x800, scoped, tag = 'input window, operand 0, single buffered']
    #allocation3 [shape = 's32[1]{0}', space=sflag, size = 0x4, scoped, tag = 'scoped memory for tpu_custom_call.1']
    #allocation4 [shape = 's32[1]{0}', space=sflag, size = 0x4, scoped, tag = 'scoped memory for tpu_custom_call.1']
    #allocation5 [shape = 'u8[2048]{0}', space=vmem, size = 0x800, scoped, tag = 'input window, operand 1, single buffered']
    #allocation6 [shape = 's32[1]{0}', space=sflag, size = 0x4, scoped, tag = 'scoped memory for tpu_custom_call.1']
    #allocation7 [shape = 'u8[65536]{0}', space=vmem, size = 0x10000, scoped, tag = 'input window, operand 2, single buffered']
    #allocation8 [shape = 'u8[65536]{0}', space=vmem, size = 0x10000, scoped, tag = 'input window, operand 4, single buffered']
    #allocation9 [shape = 's32[1]{0}', space=sflag, size = 0x4, scoped, tag = 'scoped memory for tpu_custom_call.1']
    #allocation10 [shape = 'u8[512]{0}', space=vmem, size = 0x400, scoped, tag = 'input window, operand 5, single buffered']
    #allocation11 [shape = 'u8[512]{0}', space=vmem, size = 0x400, scoped, tag = 'input window, operand 7, single buffered']
    #allocation12 [shape = 's32[1]{0}', space=sflag, size = 0x4, scoped, tag = 'scoped memory for tpu_custom_call.1']
    #allocation13 [shape = 'u8[16384]{0}', space=vmem, size = 0x4000, scoped, tag = 'input window, operand 8, single buffered']
    #allocation14 [shape = 'u8[512]{0}', space=vmem, size = 0x400, scoped, tag = 'input window, operand 9, single buffered']
    #allocation15 [shape = 's32[1]{0}', space=sflag, size = 0x4, scoped, tag = 'scoped memory for tpu_custom_call.1']
    #allocation16 [shape = 'u8[16384]{0}', space=vmem, size = 0x4000, scoped, tag = 'input window, operand 11, single buffered']
    #allocation17 [shape = 'u8[4096]{0}', space=vmem, size = 0x1000, scoped, tag = 'output window, operand 0, single buffered']
    %20 = vsyncpa [#allocation3], 0
    %21 = vsyncpa [#allocation6], 0
    %22 = vsyncpa [#allocation9], 0
    %23 = vsyncpa [#allocation12], 0
    %24 = vsyncpa [#allocation15], 0
    %25 = vsyncpa [#allocation4], 0
    // Predicated region
    $region2: #{tpu_custom_call.1} parent=1 // pred_check
      _
    $region3: #{tpu_custom_call.1} parent=1 // pred_check_branch
      %27 = sbr.rel (0) target = $region5
    $region4: #{tpu_custom_call.1} parent=1 // pred_region
      %s29 = ssub.s32 64, 64
      %30 = vsyncadd [#allocation3], %s29
      %s32 = sshll.u32 [#allocation2], 4
      %s33 = int_to_ptr.vmem [resolvable:$true] %s32
      %35 = dma.hbm_to_vmem [thread:$0]  %s0, 64, %s33, [#allocation3]
    $region5: #{tpu_custom_call.1} parent=1 // pred_fallthru
      _
    // Predicated region
    $region6: #{tpu_custom_call.1} parent=1 // pred_check
      _
    $region7: #{tpu_custom_call.1} parent=1 // pred_check_branch
      %37 = sbr.rel (0) target = $region9
    $region8: #{tpu_custom_call.1} parent=1 // pred_region
      %s39 = ssub.s32 64, 64
      %40 = vsyncadd [#allocation6], %s39
      %s42 = sshll.u32 [#allocation5], 4
      %s43 = int_to_ptr.vmem [resolvable:$true] %s42
      %45 = dma.hbm_to_vmem [thread:$0]  %s1, 64, %s43, [#allocation6]
    $region9: #{tpu_custom_call.1} parent=1 // pred_fallthru
      _
    // Predicated region
    $region10: #{tpu_custom_call.1} parent=1 // pred_check
      _
    $region11: #{tpu_custom_call.1} parent=1 // pred_check_branch
      %47 = sbr.rel (0) target = $region13
    $region12: #{tpu_custom_call.1} parent=1 // pred_region
      %s49 = ssub.s32 2048, 2048
      %50 = vsyncadd [#allocation6], %s49
      %s51 = sshll.u32 [#allocation7], 4
      %s52 = int_to_ptr.vmem [resolvable:$true] %s51
      %57 = dma.hbm_to_vmem [thread:$0]  %s2, 2048, %s52, [#allocation6], 128, 128, 8
    $region13: #{tpu_custom_call.1} parent=1 // pred_fallthru
      _
    // Predicated region
    $region14: #{tpu_custom_call.1} parent=1 // pred_check
      _
    $region15: #{tpu_custom_call.1} parent=1 // pred_check_branch
      %59 = sbr.rel (0) target = $region17
    $region16: #{tpu_custom_call.1} parent=1 // pred_region
      _
    $region17: #{tpu_custom_call.1} parent=1 // pred_fallthru
      _
    // Predicated region
    $region18: #{tpu_custom_call.1} parent=1 // pred_check
      _
    $region19: #{tpu_custom_call.1} parent=1 // pred_check_branch
      %61 = sbr.rel (0) target = $region21
    $region20: #{tpu_custom_call.1} parent=1 // pred_region
      %s63 = ssub.s32 2048, 2048
      %64 = vsyncadd [#allocation9], %s63
      %s65 = sshll.u32 [#allocation8], 4
      %s66 = int_to_ptr.vmem [resolvable:$true] %s65
      %71 = dma.hbm_to_vmem [thread:$0]  %s4, 2048, %s66, [#allocation9], 64, 64, 4
    $region21: #{tpu_custom_call.1} parent=1 // pred_fallthru
      _
    // Predicated region
    $region22: #{tpu_custom_call.1} parent=1 // pred_check
      _
    $region23: #{tpu_custom_call.1} parent=1 // pred_check_branch
      %73 = sbr.rel (0) target = $region25
    $region24: #{tpu_custom_call.1} parent=1 // pred_region
      %s75 = ssub.s32 16, 16
      %76 = vsyncadd [#allocation9], %s75
      %s78 = sshll.u32 [#allocation10], 4
      %s79 = int_to_ptr.vmem [resolvable:$true] %s78
      %81 = dma.hbm_to_vmem [thread:$0]  %s5, 16, %s79, [#allocation9]
    $region25: #{tpu_custom_call.1} parent=1 // pred_fallthru
      _
    // Predicated region
    $region26: #{tpu_custom_call.1} parent=1 // pred_check
      _
    $region27: #{tpu_custom_call.1} parent=1 // pred_check_branch
      %83 = sbr.rel (0) target = $region29
    $region28: #{tpu_custom_call.1} parent=1 // pred_region
      _
    $region29: #{tpu_custom_call.1} parent=1 // pred_fallthru
      _
    // Predicated region
    $region30: #{tpu_custom_call.1} parent=1 // pred_check
      _
    $region31: #{tpu_custom_call.1} parent=1 // pred_check_branch
      %85 = sbr.rel (0) target = $region33
    $region32: #{tpu_custom_call.1} parent=1 // pred_region
      %s87 = ssub.s32 16, 16
      %88 = vsyncadd [#allocation12], %s87
      %s90 = sshll.u32 [#allocation11], 4
      %s91 = int_to_ptr.vmem [resolvable:$true] %s90
      %93 = dma.hbm_to_vmem [thread:$0]  %s7, 16, %s91, [#allocation12]
    $region33: #{tpu_custom_call.1} parent=1 // pred_fallthru
      _
    // Predicated region
    $region34: #{tpu_custom_call.1} parent=1 // pred_check
      _
    $region35: #{tpu_custom_call.1} parent=1 // pred_check_branch
      %95 = sbr.rel (0) target = $region37
    $region36: #{tpu_custom_call.1} parent=1 // pred_region
      %s97 = ssub.s32 512, 512
      %98 = vsyncadd [#allocation12], %s97
      %s99 = sshll.u32 [#allocation13], 4
      %s100 = int_to_ptr.vmem [resolvable:$true] %s99
      %105 = dma.hbm_to_vmem [thread:$0]  %s8, 512, %s100, [#allocation12], 64, 64, 4
    $region37: #{tpu_custom_call.1} parent=1 // pred_fallthru
      _
    // Predicated region
    $region38: #{tpu_custom_call.1} parent=1 // pred_check
      _
    $region39: #{tpu_custom_call.1} parent=1 // pred_check_branch
      %107 = sbr.rel (0) target = $region41
    $region40: #{tpu_custom_call.1} parent=1 // pred_region
      %s109 = ssub.s32 16, 16
      %110 = vsyncadd [#allocation15], %s109
      %s112 = sshll.u32 [#allocation14], 4
      %s113 = int_to_ptr.vmem [resolvable:$true] %s112
      %115 = dma.hbm_to_vmem [thread:$0]  %s9, 16, %s113, [#allocation15]
    $region41: #{tpu_custom_call.1} parent=1 // pred_fallthru
      _
    // Predicated region
    $region42: #{tpu_custom_call.1} parent=1 // pred_check
      _
    $region43: #{tpu_custom_call.1} parent=1 // pred_check_branch
      %117 = sbr.rel (0) target = $region45
    $region44: #{tpu_custom_call.1} parent=1 // pred_region
      _
    $region45: #{tpu_custom_call.1} parent=1 // pred_fallthru
      _
    // Predicated region
    $region46: #{tpu_custom_call.1} parent=1 // pred_check
      _
    $region47: #{tpu_custom_call.1} parent=1 // pred_check_branch
      %119 = sbr.rel (0) target = $region49
    $region48: #{tpu_custom_call.1} parent=1 // pred_region
      %s121 = ssub.s32 512, 512
      %122 = vsyncadd [#allocation15], %s121
      %s123 = sshll.u32 [#allocation16], 4
      %s124 = int_to_ptr.vmem [resolvable:$true] %s123
      %129 = dma.hbm_to_vmem [thread:$0]  %s11, 512, %s124, [#allocation15], 64, 64, 4
    $region49: #{tpu_custom_call.1} parent=1 // pred_fallthru
      _
    // Predicated region
    $region50: #{tpu_custom_call.1} parent=1 // pred_check
      _
    $region51: #{tpu_custom_call.1} parent=1 // pred_check_branch
      %131 = sbr.rel (0) target = $region53
    $region52: #{tpu_custom_call.1} parent=1 // pred_region
      _
    $region53: #{tpu_custom_call.1} parent=1 // pred_fallthru
      _
    // Predicated region
    $region54: #{tpu_custom_call.1} parent=1 // pred_check
      _
    $region55: #{tpu_custom_call.1} parent=1 // pred_check_branch
      %133 = sbr.rel (0) target = $region57
    $region56: #{tpu_custom_call.1} parent=1 // pred_region
      _
    $region57: #{tpu_custom_call.1} parent=1 // pred_fallthru
      _
    // Predicated region
    $region58: #{tpu_custom_call.1} parent=1 // pred_check
      _
    $region59: #{tpu_custom_call.1} parent=1 // pred_check_branch
      %135 = sbr.rel (0) target = $region61
    $region60: #{tpu_custom_call.1} parent=1 // pred_region
      _
    $region61: #{tpu_custom_call.1} parent=1 // pred_fallthru
      _
    // Predicated region
    $region62: #{tpu_custom_call.1} parent=1 // pred_check
      _
    $region63: #{tpu_custom_call.1} parent=1 // pred_check_branch
      %137 = sbr.rel (0) target = $region65
    $region64: #{tpu_custom_call.1} parent=1 // pred_region
      %138 = dma.done [#allocation3], 64
    $region65: #{tpu_custom_call.1} parent=1 // pred_fallthru
      _
    // Predicated region
    $region66: #{tpu_custom_call.1} parent=1 // pred_check
      _
    $region67: #{tpu_custom_call.1} parent=1 // pred_check_branch
      %140 = sbr.rel (0) target = $region69
    $region68: #{tpu_custom_call.1} parent=1 // pred_region
      %141 = dma.done [#allocation6], 64
    $region69: #{tpu_custom_call.1} parent=1 // pred_fallthru
      _
    // Predicated region
    $region70: #{tpu_custom_call.1} parent=1 // pred_check
      _
    $region71: #{tpu_custom_call.1} parent=1 // pred_check_branch
      %143 = sbr.rel (0) target = $region73
    $region72: #{tpu_custom_call.1} parent=1 // pred_region
      %144 = dma.done [#allocation6], 2048
    $region73: #{tpu_custom_call.1} parent=1 // pred_fallthru
      _
    // Predicated region
    $region74: #{tpu_custom_call.1} parent=1 // pred_check
      _
    $region75: #{tpu_custom_call.1} parent=1 // pred_check_branch
      %146 = sbr.rel (0) target = $region77
    $region76: #{tpu_custom_call.1} parent=1 // pred_region
      %147 = dma.done [#allocation9], 2048
    $region77: #{tpu_custom_call.1} parent=1 // pred_fallthru
      _
    // Predicated region
    $region78: #{tpu_custom_call.1} parent=1 // pred_check
      _
    $region79: #{tpu_custom_call.1} parent=1 // pred_check_branch
      %149 = sbr.rel (0) target = $region81
    $region80: #{tpu_custom_call.1} parent=1 // pred_region
      %150 = dma.done [#allocation9], 16
    $region81: #{tpu_custom_call.1} parent=1 // pred_fallthru
      _
    // Predicated region
    $region82: #{tpu_custom_call.1} parent=1 // pred_check
      _
    $region83: #{tpu_custom_call.1} parent=1 // pred_check_branch
      %152 = sbr.rel (0) target = $region85
    $region84: #{tpu_custom_call.1} parent=1 // pred_region
      %153 = dma.done [#allocation12], 16
    $region85: #{tpu_custom_call.1} parent=1 // pred_fallthru
      _
    // Predicated region
    $region86: #{tpu_custom_call.1} parent=1 // pred_check
      _
    $region87: #{tpu_custom_call.1} parent=1 // pred_check_branch
      %155 = sbr.rel (0) target = $region89
    $region88: #{tpu_custom_call.1} parent=1 // pred_region
      %156 = dma.done [#allocation12], 512
    $region89: #{tpu_custom_call.1} parent=1 // pred_fallthru
      _
    // Predicated region
    $region90: #{tpu_custom_call.1} parent=1 // pred_check
      _
    $region91: #{tpu_custom_call.1} parent=1 // pred_check_branch
      %158 = sbr.rel (0) target = $region93
    $region92: #{tpu_custom_call.1} parent=1 // pred_region
      %159 = dma.done [#allocation15], 16
    $region93: #{tpu_custom_call.1} parent=1 // pred_fallthru
      _
    // Predicated region
    $region94: #{tpu_custom_call.1} parent=1 // pred_check
      _
    $region95: #{tpu_custom_call.1} parent=1 // pred_check_branch
      %161 = sbr.rel (0) target = $region97
    $region96: #{tpu_custom_call.1} parent=1 // pred_region
      %162 = dma.done [#allocation15], 512
    $region97: #{tpu_custom_call.1} parent=1 // pred_fallthru
      _
    %v164 = vld [vmem:[#allocation2] sm:$0xf]
    %v165 = vld [vmem:[#allocation7] sm:$0xff]
    %v166 = vld [vmem:[#allocation7 + $0x8] sm:$0xff]
    %v167 = vld [vmem:[#allocation7 + $0x10] sm:$0xff]
    %v168 = vld [vmem:[#allocation7 + $0x18] sm:$0xff]
    %v169 = vld [vmem:[#allocation7 + $0x20] sm:$0xff]
    %v170 = vld [vmem:[#allocation7 + $0x28] sm:$0xff]
    %v171 = vld [vmem:[#allocation7 + $0x30] sm:$0xff]
    %v172 = vld [vmem:[#allocation7 + $0x38] sm:$0xff]
    %v173 = vld [vmem:[#allocation7 + $0x40] sm:$0xff]
    %v174 = vld [vmem:[#allocation7 + $0x48] sm:$0xff]
    %v175 = vld [vmem:[#allocation7 + $0x50] sm:$0xff]
    %v176 = vld [vmem:[#allocation7 + $0x58] sm:$0xff]
    %v177 = vld [vmem:[#allocation7 + $0x60] sm:$0xff]
    %v178 = vld [vmem:[#allocation7 + $0x68] sm:$0xff]
    %v179 = vld [vmem:[#allocation7 + $0x70] sm:$0xff]
    %v180 = vld [vmem:[#allocation7 + $0x78] sm:$0xff]
    %v181 = vld [vmem:[%s3] sm:$0x3]
    %v183 = vlaneseq
    %v184 = vshrl.u32 %v183, 7
    %v185 = vsub.s32 0, %v184
    %v186 = vrot.slane %v181, %v185
    %v187 = vlaneseq
    %v188 = vshrl.u32 %v187, 7
    %v189 = vsub.s32 1, %v188
    %v190 = vrot.slane %v181, %v189
    %v209 = vunpack.c.l.b16 %v165
    %v210 = vunpack.c.h.b16 %v165
    %v211 = vunpack.c.l.b16 %v166
    %v212 = vunpack.c.h.b16 %v166
    %v213 = vunpack.c.l.b16 %v167
    %v214 = vunpack.c.h.b16 %v167
    %v215 = vunpack.c.l.b16 %v168
    %v216 = vunpack.c.h.b16 %v168
    %v217 = vunpack.c.l.b16 %v169
    %v218 = vunpack.c.h.b16 %v169
    %v219 = vunpack.c.l.b16 %v170
    %v220 = vunpack.c.h.b16 %v170
    %v221 = vunpack.c.l.b16 %v171
    %v222 = vunpack.c.h.b16 %v171
    %v223 = vunpack.c.l.b16 %v172
    %v224 = vunpack.c.h.b16 %v172
    %v225 = vunpack.c.l.b16 %v173
    %v226 = vunpack.c.h.b16 %v173
    %v227 = vunpack.c.l.b16 %v174
    %v228 = vunpack.c.h.b16 %v174
    %v229 = vunpack.c.l.b16 %v175
    %v230 = vunpack.c.h.b16 %v175
    %v231 = vunpack.c.l.b16 %v176
    %v232 = vunpack.c.h.b16 %v176
    %v233 = vunpack.c.l.b16 %v177
    %v234 = vunpack.c.h.b16 %v177
    %v235 = vunpack.c.l.b16 %v178
    %v236 = vunpack.c.h.b16 %v178
    %v237 = vunpack.c.l.b16 %v179
    %v238 = vunpack.c.h.b16 %v179
    %v239 = vunpack.c.l.b16 %v180
    %v240 = vunpack.c.h.b16 %v180
    %v241 = vpack.c.b16 %v211, %v209
    %v242 = vpack.c.b16 %v212, %v210
    %v243 = vpack.c.b16 %v215, %v213
    %v244 = vpack.c.b16 %v216, %v214
    %v245 = vpack.c.b16 %v219, %v217
    %v246 = vpack.c.b16 %v220, %v218
    %v247 = vpack.c.b16 %v223, %v221
    %v248 = vpack.c.b16 %v224, %v222
    %v249 = vpack.c.b16 %v227, %v225
    %v250 = vpack.c.b16 %v228, %v226
    %v251 = vpack.c.b16 %v231, %v229
    %v252 = vpack.c.b16 %v232, %v230
    %v253 = vpack.c.b16 %v235, %v233
    %v254 = vpack.c.b16 %v236, %v234
    %v255 = vpack.c.b16 %v239, %v237
    %v256 = vpack.c.b16 %v240, %v238
    %273 = vmatprep.subr.bf16.mxu0 %v242
    %274 = vmatpush1.bf16.msra.mxu0 %v241
    %275 = vmatprep.subr.bf16.mxu0 %v244
    %276 = vmatpush1.bf16.msra.mxu0 %v243
    %277 = vmatprep.subr.bf16.mxu0 %v246
    %278 = vmatpush1.bf16.msra.mxu0 %v245
    %279 = vmatprep.subr.bf16.mxu0 %v248
    %280 = vmatpush1.bf16.msra.mxu0 %v247
    %281 = vmatprep.subr.bf16.mxu0 %v250
    %282 = vmatpush1.bf16.msra.mxu0 %v249
    %283 = vmatprep.subr.bf16.mxu0 %v252
    %284 = vmatpush1.bf16.msra.mxu0 %v251
    %285 = vmatprep.subr.bf16.mxu0 %v254
    %286 = vmatpush1.bf16.msra.mxu0 %v253
    %287 = vmatprep.subr.bf16.mxu0 %v256
    %288 = vmatpush1.bf16.msra.mxu0 %v255
    %289 = vmatprep.subr.bf16.mxu0 0
    %290 = vmatpush1.bf16.msra.mxu0 0
    %291 = vmatprep.subr.bf16.mxu0 0
    %292 = vmatpush1.bf16.msra.mxu0 0
    %293 = vmatprep.subr.bf16.mxu0 0
    %294 = vmatpush1.bf16.msra.mxu0 0
    %295 = vmatprep.subr.bf16.mxu0 0
    %296 = vmatpush1.bf16.msra.mxu0 0
    %297 = vmatprep.subr.bf16.mxu0 0
    %298 = vmatpush1.bf16.msra.mxu0 0
    %299 = vmatprep.subr.bf16.mxu0 0
    %300 = vmatpush1.bf16.msra.mxu0 0
    %301 = vmatprep.subr.bf16.mxu0 0
    %302 = vmatpush1.bf16.msra.mxu0 0
    %303 = vmatprep.subr.bf16.mxu0 0
    %304 = vmatpush1.bf16.msra.mxu0 0
    %305 = vmatprep.mubr.bf16.mxu0 0
    %306 = vmatmul.mubr.bf16.gmra.mrb[0].mxu0 %v164
    %v307 = vpop.f32.mrb[0].mxu0
    %v308 = vadd.f32 %v186, %v307
    %v309 = vpop.f32.mrb[0].mxu0
    %v310 = vadd.f32 %v190, %v309
    %v311 = vpop.f32.mrb[0].mxu0
    %v312 = vpop.f32.mrb[0].mxu0
    %313 = vdwg.mxu0
    %v314 = vmax.f32 %v308, 0.0
    %v315 = vmax.f32 %v310, 0.0
    %v316 = vpack.c.bf16 %v314, %v314
    %v317 = vpack.c.bf16 %v315, %v315
    %v318 = vld [vmem:[#allocation8] sm:$0xf]
    %v319 = vld [vmem:[#allocation8 + $0x4] sm:$0xf]
    %v320 = vld [vmem:[#allocation8 + $0x8] sm:$0xf]
    %v321 = vld [vmem:[#allocation8 + $0xc] sm:$0xf]
    %v322 = vld [vmem:[#allocation8 + $0x10] sm:$0xf]
    %v323 = vld [vmem:[#allocation8 + $0x14] sm:$0xf]
    %v324 = vld [vmem:[#allocation8 + $0x18] sm:$0xf]
    %v325 = vld [vmem:[#allocation8 + $0x1c] sm:$0xf]
    %v326 = vld [vmem:[#allocation8 + $0x20] sm:$0xf]
    %v327 = vld [vmem:[#allocation8 + $0x24] sm:$0xf]
    %v328 = vld [vmem:[#allocation8 + $0x28] sm:$0xf]
    %v329 = vld [vmem:[#allocation8 + $0x2c] sm:$0xf]
    %v330 = vld [vmem:[#allocation8 + $0x30] sm:$0xf]
    %v331 = vld [vmem:[#allocation8 + $0x34] sm:$0xf]
    %v332 = vld [vmem:[#allocation8 + $0x38] sm:$0xf]
    %v333 = vld [vmem:[#allocation8 + $0x3c] sm:$0xf]
    %v334 = vld [vmem:[#allocation8 + $0x40] sm:$0xf]
    %v335 = vld [vmem:[#allocation8 + $0x44] sm:$0xf]
    %v336 = vld [vmem:[#allocation8 + $0x48] sm:$0xf]
    %v337 = vld [vmem:[#allocation8 + $0x4c] sm:$0xf]
    %v338 = vld [vmem:[#allocation8 + $0x50] sm:$0xf]
    %v339 = vld [vmem:[#allocation8 + $0x54] sm:$0xf]
    %v340 = vld [vmem:[#allocation8 + $0x58] sm:$0xf]
    %v341 = vld [vmem:[#allocation8 + $0x5c] sm:$0xf]
    %v342 = vld [vmem:[#allocation8 + $0x60] sm:$0xf]
    %v343 = vld [vmem:[#allocation8 + $0x64] sm:$0xf]
    %v344 = vld [vmem:[#allocation8 + $0x68] sm:$0xf]
    %v345 = vld [vmem:[#allocation8 + $0x6c] sm:$0xf]
    %v346 = vld [vmem:[#allocation8 + $0x70] sm:$0xf]
    %v347 = vld [vmem:[#allocation8 + $0x74] sm:$0xf]
    %v348 = vld [vmem:[#allocation8 + $0x78] sm:$0xf]
    %v349 = vld [vmem:[#allocation8 + $0x7c] sm:$0xf]
    %v350 = vld [vmem:[#allocation10] sm:$0x1]
    %v352 = vlaneseq
    %v353 = vshrl.u32 %v352, 7
    %v354 = vsub.s32 0, %v353
    %v355 = vrot.slane %v350, %v354
    %v389 = vunpack.c.l.b16 %v318
    %v390 = vunpack.c.l.b16 %v319
    %v391 = vunpack.c.l.b16 %v320
    %v392 = vunpack.c.l.b16 %v321
    %v393 = vunpack.c.l.b16 %v322
    %v394 = vunpack.c.l.b16 %v323
    %v395 = vunpack.c.l.b16 %v324
    %v396 = vunpack.c.l.b16 %v325
    %v397 = vunpack.c.l.b16 %v326
    %v398 = vunpack.c.l.b16 %v327
    %v399 = vunpack.c.l.b16 %v328
    %v400 = vunpack.c.l.b16 %v329
    %v401 = vunpack.c.l.b16 %v330
    %v402 = vunpack.c.l.b16 %v331
    %v403 = vunpack.c.l.b16 %v332
    %v404 = vunpack.c.l.b16 %v333
    %v405 = vunpack.c.l.b16 %v334
    %v406 = vunpack.c.l.b16 %v335
    %v407 = vunpack.c.l.b16 %v336
    %v408 = vunpack.c.l.b16 %v337
    %v409 = vunpack.c.l.b16 %v338
    %v410 = vunpack.c.l.b16 %v339
    %v411 = vunpack.c.l.b16 %v340
    %v412 = vunpack.c.l.b16 %v341
    %v413 = vunpack.c.l.b16 %v342
    %v414 = vunpack.c.l.b16 %v343
    %v415 = vunpack.c.l.b16 %v344
    %v416 = vunpack.c.l.b16 %v345
    %v417 = vunpack.c.l.b16 %v346
    %v418 = vunpack.c.l.b16 %v347
    %v419 = vunpack.c.l.b16 %v348
    %v420 = vunpack.c.l.b16 %v349
    %v421 = vpack.c.b16 %v390, %v389
    %v422 = vpack.c.b16 %v392, %v391
    %v423 = vpack.c.b16 %v394, %v393
    %v424 = vpack.c.b16 %v396, %v395
    %v425 = vpack.c.b16 %v398, %v397
    %v426 = vpack.c.b16 %v400, %v399
    %v427 = vpack.c.b16 %v402, %v401
    %v428 = vpack.c.b16 %v404, %v403
    %v429 = vpack.c.b16 %v406, %v405
    %v430 = vpack.c.b16 %v408, %v407
    %v431 = vpack.c.b16 %v410, %v409
    %v432 = vpack.c.b16 %v412, %v411
    %v433 = vpack.c.b16 %v414, %v413
    %v434 = vpack.c.b16 %v416, %v415
    %v435 = vpack.c.b16 %v418, %v417
    %v436 = vpack.c.b16 %v420, %v419
    %453 = vmatprep.subr.bf16.mxu0 0
    %454 = vmatpush1.bf16.msra.mxu0 %v421
    %455 = vmatprep.subr.bf16.mxu0 0
    %456 = vmatpush1.bf16.msra.mxu0 %v422
    %457 = vmatprep.subr.bf16.mxu0 0
    %458 = vmatpush1.bf16.msra.mxu0 %v423
    %459 = vmatprep.subr.bf16.mxu0 0
    %460 = vmatpush1.bf16.msra.mxu0 %v424
    %461 = vmatprep.subr.bf16.mxu0 0
    %462 = vmatpush1.bf16.msra.mxu0 %v425
    %463 = vmatprep.subr.bf16.mxu0 0
    %464 = vmatpush1.bf16.msra.mxu0 %v426
    %465 = vmatprep.subr.bf16.mxu0 0
    %466 = vmatpush1.bf16.msra.mxu0 %v427
    %467 = vmatprep.subr.bf16.mxu0 0
    %468 = vmatpush1.bf16.msra.mxu0 %v428
    %469 = vmatprep.subr.bf16.mxu0 0
    %470 = vmatpush1.bf16.msra.mxu0 %v429
    %471 = vmatprep.subr.bf16.mxu0 0
    %472 = vmatpush1.bf16.msra.mxu0 %v430
    %473 = vmatprep.subr.bf16.mxu0 0
    %474 = vmatpush1.bf16.msra.mxu0 %v431
    %475 = vmatprep.subr.bf16.mxu0 0
    %476 = vmatpush1.bf16.msra.mxu0 %v432
    %477 = vmatprep.subr.bf16.mxu0 0
    %478 = vmatpush1.bf16.msra.mxu0 %v433
    %479 = vmatprep.subr.bf16.mxu0 0
    %480 = vmatpush1.bf16.msra.mxu0 %v434
    %481 = vmatprep.subr.bf16.mxu0 0
    %482 = vmatpush1.bf16.msra.mxu0 %v435
    %483 = vmatprep.subr.bf16.mxu0 0
    %484 = vmatpush1.bf16.msra.mxu0 %v436
    %485 = vmatprep.mubr.bf16.mxu0 %v317
    %486 = vmatmul.mubr.bf16.gmra.mrb[0].mxu0 %v316
    %v487 = vpop.f32.mrb[0].mxu0
    %v488 = vadd.f32 %v355, %v487
    %v489 = vpop.f32.mrb[0].mxu0
    %v490 = vpop.f32.mrb[0].mxu0
    %v491 = vpop.f32.mrb[0].mxu0
    %492 = vdwg.mxu0
    %v493 = vmax.f32 %v488, 0.0
    %v494 = vpack.c.bf16 %v493, %v493
    %v495 = vld [vmem:[#allocation5] sm:$0xf]
    %v496 = vld [vmem:[%s6] sm:$0xf]
    %v497 = vld [vmem:[%s6 + $0x4] sm:$0xf]
    %v498 = vld [vmem:[%s6 + $0x8] sm:$0xf]
    %v499 = vld [vmem:[%s6 + $0xc] sm:$0xf]
    %v500 = vld [vmem:[%s6 + $0x10] sm:$0xf]
    %v501 = vld [vmem:[%s6 + $0x14] sm:$0xf]
    %v502 = vld [vmem:[%s6 + $0x18] sm:$0xf]
    %v503 = vld [vmem:[%s6 + $0x1c] sm:$0xf]
    %v504 = vld [vmem:[%s6 + $0x20] sm:$0xf]
    %v505 = vld [vmem:[%s6 + $0x24] sm:$0xf]
    %v506 = vld [vmem:[%s6 + $0x28] sm:$0xf]
    %v507 = vld [vmem:[%s6 + $0x2c] sm:$0xf]
    %v508 = vld [vmem:[%s6 + $0x30] sm:$0xf]
    %v509 = vld [vmem:[%s6 + $0x34] sm:$0xf]
    %v510 = vld [vmem:[%s6 + $0x38] sm:$0xf]
    %v511 = vld [vmem:[%s6 + $0x3c] sm:$0xf]
    %v512 = vld [vmem:[#allocation11] sm:$0x1]
    %v514 = vlaneseq
    %v515 = vshrl.u32 %v514, 7
    %v516 = vsub.s32 0, %v515
    %v517 = vrot.slane %v512, %v516
    %v535 = vunpack.c.l.b16 %v496
    %v536 = vunpack.c.l.b16 %v497
    %v537 = vunpack.c.l.b16 %v498
    %v538 = vunpack.c.l.b16 %v499
    %v539 = vunpack.c.l.b16 %v500
    %v540 = vunpack.c.l.b16 %v501
    %v541 = vunpack.c.l.b16 %v502
    %v542 = vunpack.c.l.b16 %v503
    %v543 = vunpack.c.l.b16 %v504
    %v544 = vunpack.c.l.b16 %v505
    %v545 = vunpack.c.l.b16 %v506
    %v546 = vunpack.c.l.b16 %v507
    %v547 = vunpack.c.l.b16 %v508
    %v548 = vunpack.c.l.b16 %v509
    %v549 = vunpack.c.l.b16 %v510
    %v550 = vunpack.c.l.b16 %v511
    %v551 = vpack.c.b16 %v536, %v535
    %v552 = vpack.c.b16 %v538, %v537
    %v553 = vpack.c.b16 %v540, %v539
    %v554 = vpack.c.b16 %v542, %v541
    %v555 = vpack.c.b16 %v544, %v543
    %v556 = vpack.c.b16 %v546, %v545
    %v557 = vpack.c.b16 %v548, %v547
    %v558 = vpack.c.b16 %v550, %v549
    %567 = vmatprep.subr.bf16.mxu0 0
    %568 = vmatpush1.bf16.msra.mxu0 %v551
    %569 = vmatprep.subr.bf16.mxu0 0
    %570 = vmatpush1.bf16.msra.mxu0 %v552
    %571 = vmatprep.subr.bf16.mxu0 0
    %572 = vmatpush1.bf16.msra.mxu0 %v553
    %573 = vmatprep.subr.bf16.mxu0 0
    %574 = vmatpush1.bf16.msra.mxu0 %v554
    %575 = vmatprep.subr.bf16.mxu0 0
    %576 = vmatpush1.bf16.msra.mxu0 %v555
    %577 = vmatprep.subr.bf16.mxu0 0
    %578 = vmatpush1.bf16.msra.mxu0 %v556
    %579 = vmatprep.subr.bf16.mxu0 0
    %580 = vmatpush1.bf16.msra.mxu0 %v557
    %581 = vmatprep.subr.bf16.mxu0 0
    %582 = vmatpush1.bf16.msra.mxu0 %v558
    %583 = vmatprep.subr.bf16.mxu0 0
    %584 = vmatpush1.bf16.msra.mxu0 0
    %585 = vmatprep.subr.bf16.mxu0 0
    %586 = vmatpush1.bf16.msra.mxu0 0
    %587 = vmatprep.subr.bf16.mxu0 0
    %588 = vmatpush1.bf16.msra.mxu0 0
    %589 = vmatprep.subr.bf16.mxu0 0
    %590 = vmatpush1.bf16.msra.mxu0 0
    %591 = vmatprep.subr.bf16.mxu0 0
    %592 = vmatpush1.bf16.msra.mxu0 0
    %593 = vmatprep.subr.bf16.mxu0 0
    %594 = vmatpush1.bf16.msra.mxu0 0
    %595 = vmatprep.subr.bf16.mxu0 0
    %596 = vmatpush1.bf16.msra.mxu0 0
    %597 = vmatprep.subr.bf16.mxu0 0
    %598 = vmatpush1.bf16.msra.mxu0 0
    %599 = vmatprep.mubr.bf16.mxu0 0
    %600 = vmatmul.mubr.bf16.gmra.mrb[0].mxu0 %v495
    %v601 = vpop.f32.mrb[0].mxu0
    %v602 = vadd.f32 %v517, %v601
    %v603 = vpop.f32.mrb[0].mxu0
    %v604 = vpop.f32.mrb[0].mxu0
    %v605 = vpop.f32.mrb[0].mxu0
    %606 = vdwg.mxu0
    %v607 = vmax.f32 %v602, 0.0
    %v608 = vpack.c.bf16 %v607, %v607
    %v609 = vld [vmem:[#allocation13] sm:$0xf]
    %v610 = vld [vmem:[#allocation13 + $0x4] sm:$0xf]
    %v611 = vld [vmem:[#allocation13 + $0x8] sm:$0xf]
    %v612 = vld [vmem:[#allocation13 + $0xc] sm:$0xf]
    %v613 = vld [vmem:[#allocation13 + $0x10] sm:$0xf]
    %v614 = vld [vmem:[#allocation13 + $0x14] sm:$0xf]
    %v615 = vld [vmem:[#allocation13 + $0x18] sm:$0xf]
    %v616 = vld [vmem:[#allocation13 + $0x1c] sm:$0xf]
    %v617 = vld [vmem:[#allocation14] sm:$0x1]
    %v619 = vlaneseq
    %v620 = vshrl.u32 %v619, 7
    %v621 = vsub.s32 0, %v620
    %v622 = vrot.slane %v617, %v621
    %v632 = vunpack.c.l.b16 %v609
    %v633 = vunpack.c.l.b16 %v610
    %v634 = vunpack.c.l.b16 %v611
    %v635 = vunpack.c.l.b16 %v612
    %v636 = vunpack.c.l.b16 %v613
    %v637 = vunpack.c.l.b16 %v614
    %v638 = vunpack.c.l.b16 %v615
    %v639 = vunpack.c.l.b16 %v616
    %v640 = vpack.c.b16 %v633, %v632
    %v641 = vpack.c.b16 %v635, %v634
    %v642 = vpack.c.b16 %v637, %v636
    %v643 = vpack.c.b16 %v639, %v638
    %vm648 = vcmask 523264
    %v650 = vsel %vm648, %v608, 0
    %652 = vmatprep.subr.bf16.mxu0 0
    %653 = vmatpush1.bf16.msra.mxu0 %v640
    %654 = vmatprep.subr.bf16.mxu0 0
    %655 = vmatpush1.bf16.msra.mxu0 %v641
    %656 = vmatprep.subr.bf16.mxu0 0
    %657 = vmatpush1.bf16.msra.mxu0 %v642
    %658 = vmatprep.subr.bf16.mxu0 0
    %659 = vmatpush1.bf16.msra.mxu0 %v643
    %660 = vmatprep.subr.bf16.mxu0 0
    %661 = vmatpush1.bf16.msra.mxu0 0
    %662 = vmatprep.subr.bf16.mxu0 0
    %663 = vmatpush1.bf16.msra.mxu0 0
    %664 = vmatprep.subr.bf16.mxu0 0
    %665 = vmatpush1.bf16.msra.mxu0 0
    %666 = vmatprep.subr.bf16.mxu0 0
    %667 = vmatpush1.bf16.msra.mxu0 0
    %668 = vmatprep.subr.bf16.mxu0 0
    %669 = vmatpush1.bf16.msra.mxu0 0
    %670 = vmatprep.subr.bf16.mxu0 0
    %671 = vmatpush1.bf16.msra.mxu0 0
    %672 = vmatprep.subr.bf16.mxu0 0
    %673 = vmatpush1.bf16.msra.mxu0 0
    %674 = vmatprep.subr.bf16.mxu0 0
    %675 = vmatpush1.bf16.msra.mxu0 0
    %676 = vmatprep.subr.bf16.mxu0 0
    %677 = vmatpush1.bf16.msra.mxu0 0
    %678 = vmatprep.subr.bf16.mxu0 0
    %679 = vmatpush1.bf16.msra.mxu0 0
    %680 = vmatprep.subr.bf16.mxu0 0
    %681 = vmatpush1.bf16.msra.mxu0 0
    %682 = vmatprep.subr.bf16.mxu0 0
    %683 = vmatpush1.bf16.msra.mxu0 0
    %684 = vmatprep.mubr.bf16.mxu0 0
    %685 = vmatmul.mubr.bf16.gmra.mrb[0].mxu0 %v650
    %v686 = vpop.f32.mrb[0].mxu0
    %v687 = vadd.f32 %v622, %v686
    %v688 = vpop.f32.mrb[0].mxu0
    %v689 = vpop.f32.mrb[0].mxu0
    %v690 = vpop.f32.mrb[0].mxu0
    %691 = vdwg.mxu0
    %v692 = vmax.f32 %v687, 0.0
    %v693 = vpack.c.bf16 %v692, %v692
    %v694 = vld [vmem:[%s10] sm:$0xf]
    %v695 = vld [vmem:[%s10 + $0x4] sm:$0xf]
    %v696 = vld [vmem:[%s10 + $0x8] sm:$0xf]
    %v697 = vld [vmem:[%s10 + $0xc] sm:$0xf]
    %v698 = vld [vmem:[%s10 + $0x10] sm:$0xf]
    %v699 = vld [vmem:[%s10 + $0x14] sm:$0xf]
    %v700 = vld [vmem:[%s10 + $0x18] sm:$0xf]
    %v701 = vld [vmem:[%s10 + $0x1c] sm:$0xf]
    %v702 = vld [vmem:[%s10 + $0x20] sm:$0xf]
    %v703 = vld [vmem:[%s10 + $0x24] sm:$0xf]
    %v704 = vld [vmem:[%s10 + $0x28] sm:$0xf]
    %v705 = vld [vmem:[%s10 + $0x2c] sm:$0xf]
    %v706 = vld [vmem:[%s10 + $0x30] sm:$0xf]
    %v707 = vld [vmem:[%s10 + $0x34] sm:$0xf]
    %v708 = vld [vmem:[%s10 + $0x38] sm:$0xf]
    %v709 = vld [vmem:[%s10 + $0x3c] sm:$0xf]
    %v710 = vld [vmem:[#allocation16] sm:$0xf]
    %v711 = vld [vmem:[#allocation16 + $0x4] sm:$0xf]
    %v712 = vld [vmem:[#allocation16 + $0x8] sm:$0xf]
    %v713 = vld [vmem:[#allocation16 + $0xc] sm:$0xf]
    %v714 = vld [vmem:[#allocation16 + $0x10] sm:$0xf]
    %v715 = vld [vmem:[#allocation16 + $0x14] sm:$0xf]
    %v716 = vld [vmem:[#allocation16 + $0x18] sm:$0xf]
    %v717 = vld [vmem:[#allocation16 + $0x1c] sm:$0xf]
    %v726 = vunpack.c.l.b16 %v710
    %v727 = vunpack.c.l.b16 %v711
    %v728 = vunpack.c.l.b16 %v712
    %v729 = vunpack.c.l.b16 %v713
    %v730 = vunpack.c.l.b16 %v714
    %v731 = vunpack.c.l.b16 %v715
    %v732 = vunpack.c.l.b16 %v716
    %v733 = vunpack.c.l.b16 %v717
    %v734 = vpack.c.b16 %v727, %v726
    %v735 = vpack.c.b16 %v729, %v728
    %v736 = vpack.c.b16 %v731, %v730
    %v737 = vpack.c.b16 %v733, %v732
    %v743 = vsel %vm648, %v693, 0
    %745 = vmatprep.subr.bf16.mxu0 0
    %746 = vmatpush1.bf16.msra.mxu0 %v734
    %747 = vmatprep.subr.bf16.mxu0 0
    %748 = vmatpush1.bf16.msra.mxu0 %v735
    %749 = vmatprep.subr.bf16.mxu0 0
    %750 = vmatpush1.bf16.msra.mxu0 %v736
    %751 = vmatprep.subr.bf16.mxu0 0
    %752 = vmatpush1.bf16.msra.mxu0 %v737
    %753 = vmatprep.subr.bf16.mxu0 0
    %754 = vmatpush1.bf16.msra.mxu0 0
    %755 = vmatprep.subr.bf16.mxu0 0
    %756 = vmatpush1.bf16.msra.mxu0 0
    %757 = vmatprep.subr.bf16.mxu0 0
    %758 = vmatpush1.bf16.msra.mxu0 0
    %759 = vmatprep.subr.bf16.mxu0 0
    %760 = vmatpush1.bf16.msra.mxu0 0
    %761 = vmatprep.subr.bf16.mxu0 0
    %762 = vmatpush1.bf16.msra.mxu0 0
    %763 = vmatprep.subr.bf16.mxu0 0
    %764 = vmatpush1.bf16.msra.mxu0 0
    %765 = vmatprep.subr.bf16.mxu0 0
    %766 = vmatpush1.bf16.msra.mxu0 0
    %767 = vmatprep.subr.bf16.mxu0 0
    %768 = vmatpush1.bf16.msra.mxu0 0
    %769 = vmatprep.subr.bf16.mxu0 0
    %770 = vmatpush1.bf16.msra.mxu0 0
    %771 = vmatprep.subr.bf16.mxu0 0
    %772 = vmatpush1.bf16.msra.mxu0 0
    %773 = vmatprep.subr.bf16.mxu0 0
    %774 = vmatpush1.bf16.msra.mxu0 0
    %775 = vmatprep.subr.bf16.mxu0 0
    %776 = vmatpush1.bf16.msra.mxu0 0
    %777 = vmatprep.mubr.bf16.mxu0 0
    %778 = vmatmul.mubr.bf16.gmra.mrb[0].mxu0 %v743
    %v779 = vpop.f32.mrb[0].mxu0
    %v780 = vadd.f32 0.0, %v779
    %v781 = vpop.f32.mrb[0].mxu0
    %v782 = vpop.f32.mrb[0].mxu0
    %v783 = vpop.f32.mrb[0].mxu0
    %784 = vdwg.mxu0
    %v801 = vunpack.c.l.b16 %v694
    %v802 = vunpack.c.l.b16 %v695
    %v803 = vunpack.c.l.b16 %v696
    %v804 = vunpack.c.l.b16 %v697
    %v805 = vunpack.c.l.b16 %v698
    %v806 = vunpack.c.l.b16 %v699
    %v807 = vunpack.c.l.b16 %v700
    %v808 = vunpack.c.l.b16 %v701
    %v809 = vunpack.c.l.b16 %v702
    %v810 = vunpack.c.l.b16 %v703
    %v811 = vunpack.c.l.b16 %v704
    %v812 = vunpack.c.l.b16 %v705
    %v813 = vunpack.c.l.b16 %v706
    %v814 = vunpack.c.l.b16 %v707
    %v815 = vunpack.c.l.b16 %v708
    %v816 = vunpack.c.l.b16 %v709
    %v817 = vpack.c.b16 %v802, %v801
    %v818 = vpack.c.b16 %v804, %v803
    %v819 = vpack.c.b16 %v806, %v805
    %v820 = vpack.c.b16 %v808, %v807
    %v821 = vpack.c.b16 %v810, %v809
    %v822 = vpack.c.b16 %v812, %v811
    %v823 = vpack.c.b16 %v814, %v813
    %v824 = vpack.c.b16 %v816, %v815
    %833 = vmatprep.subr.bf16.mxu0 0
    %834 = vmatpush1.bf16.msra.mxu0 %v817
    %835 = vmatprep.subr.bf16.mxu0 0
    %836 = vmatpush1.bf16.msra.mxu0 %v818
    %837 = vmatprep.subr.bf16.mxu0 0
    %838 = vmatpush1.bf16.msra.mxu0 %v819
    %839 = vmatprep.subr.bf16.mxu0 0
    %840 = vmatpush1.bf16.msra.mxu0 %v820
    %841 = vmatprep.subr.bf16.mxu0 0
    %842 = vmatpush1.bf16.msra.mxu0 %v821
    %843 = vmatprep.subr.bf16.mxu0 0
    %844 = vmatpush1.bf16.msra.mxu0 %v822
    %845 = vmatprep.subr.bf16.mxu0 0
    %846 = vmatpush1.bf16.msra.mxu0 %v823
    %847 = vmatprep.subr.bf16.mxu0 0
    %848 = vmatpush1.bf16.msra.mxu0 %v824
    %849 = vmatprep.subr.bf16.mxu0 0
    %850 = vmatpush1.bf16.msra.mxu0 0
    %851 = vmatprep.subr.bf16.mxu0 0
    %852 = vmatpush1.bf16.msra.mxu0 0
    %853 = vmatprep.subr.bf16.mxu0 0
    %854 = vmatpush1.bf16.msra.mxu0 0
    %855 = vmatprep.subr.bf16.mxu0 0
    %856 = vmatpush1.bf16.msra.mxu0 0
    %857 = vmatprep.subr.bf16.mxu0 0
    %858 = vmatpush1.bf16.msra.mxu0 0
    %859 = vmatprep.subr.bf16.mxu0 0
    %860 = vmatpush1.bf16.msra.mxu0 0
    %861 = vmatprep.subr.bf16.mxu0 0
    %862 = vmatpush1.bf16.msra.mxu0 0
    %863 = vmatprep.subr.bf16.mxu0 0
    %864 = vmatpush1.bf16.msra.mxu0 0
    %865 = vmatprep.mubr.bf16.mxu0 0
    %866 = vmatmul.mubr.bf16.gmra.mrb[0].mxu0 %v494
    %v867 = vpop.f32.mrb[0].mxu0
    %v868 = vadd.f32 %v780, %v867
    %v869 = vpop.f32.mrb[0].mxu0
    %v870 = vpop.f32.mrb[0].mxu0
    %v871 = vpop.f32.mrb[0].mxu0
    %872 = vdwg.mxu0
    %v873 = vld [vmem:[%s12] sm:$0x1]
    %v875 = vlaneseq
    %v876 = vshrl.u32 %v875, 7
    %v877 = vsub.s32 0, %v876
    %v878 = vrot.slane %v873, %v877
    %v880 = vadd.f32 %v868, %v878
    %v881 = vmax.f32 %v880, 0.0
    %v882 = vpack.c.bf16 %v881, %v881
    %v883 = vld [vmem:[%s13] sm:$0xf]
    %v884 = vld [vmem:[%s13 + $0x4] sm:$0xf]
    %v885 = vld [vmem:[%s13 + $0x8] sm:$0xf]
    %v886 = vld [vmem:[%s13 + $0xc] sm:$0xf]
    %v887 = vld [vmem:[%s13 + $0x10] sm:$0xf]
    %v888 = vld [vmem:[%s13 + $0x14] sm:$0xf]
    %v889 = vld [vmem:[%s13 + $0x18] sm:$0xf]
    %v890 = vld [vmem:[%s13 + $0x1c] sm:$0xf]
    %v891 = vld [vmem:[%s13 + $0x20] sm:$0xf]
    %v892 = vld [vmem:[%s13 + $0x24] sm:$0xf]
    %v893 = vld [vmem:[%s13 + $0x28] sm:$0xf]
    %v894 = vld [vmem:[%s13 + $0x2c] sm:$0xf]
    %v895 = vld [vmem:[%s13 + $0x30] sm:$0xf]
    %v896 = vld [vmem:[%s13 + $0x34] sm:$0xf]
    %v897 = vld [vmem:[%s13 + $0x38] sm:$0xf]
    %v898 = vld [vmem:[%s13 + $0x3c] sm:$0xf]
    %v899 = vld [vmem:[%s14] sm:$0x1]
    %v901 = vlaneseq
    %v902 = vshrl.u32 %v901, 7
    %v903 = vsub.s32 0, %v902
    %v904 = vrot.slane %v899, %v903
    %v922 = vunpack.c.l.b16 %v883
    %v923 = vunpack.c.l.b16 %v884
    %v924 = vunpack.c.l.b16 %v885
    %v925 = vunpack.c.l.b16 %v886
    %v926 = vunpack.c.l.b16 %v887
    %v927 = vunpack.c.l.b16 %v888
    %v928 = vunpack.c.l.b16 %v889
    %v929 = vunpack.c.l.b16 %v890
    %v930 = vunpack.c.l.b16 %v891
    %v931 = vunpack.c.l.b16 %v892
    %v932 = vunpack.c.l.b16 %v893
    %v933 = vunpack.c.l.b16 %v894
    %v934 = vunpack.c.l.b16 %v895
    %v935 = vunpack.c.l.b16 %v896
    %v936 = vunpack.c.l.b16 %v897
    %v937 = vunpack.c.l.b16 %v898
    %v938 = vpack.c.b16 %v923, %v922
    %v939 = vpack.c.b16 %v925, %v924
    %v940 = vpack.c.b16 %v927, %v926
    %v941 = vpack.c.b16 %v929, %v928
    %v942 = vpack.c.b16 %v931, %v930
    %v943 = vpack.c.b16 %v933, %v932
    %v944 = vpack.c.b16 %v935, %v934
    %v945 = vpack.c.b16 %v937, %v936
    %954 = vmatprep.subr.bf16.mxu0 0
    %955 = vmatpush1.bf16.msra.mxu0 %v938
    %956 = vmatprep.subr.bf16.mxu0 0
    %957 = vmatpush1.bf16.msra.mxu0 %v939
    %958 = vmatprep.subr.bf16.mxu0 0
    %959 = vmatpush1.bf16.msra.mxu0 %v940
    %960 = vmatprep.subr.bf16.mxu0 0
    %961 = vmatpush1.bf16.msra.mxu0 %v941
    %962 = vmatprep.subr.bf16.mxu0 0
    %963 = vmatpush1.bf16.msra.mxu0 %v942
    %964 = vmatprep.subr.bf16.mxu0 0
    %965 = vmatpush1.bf16.msra.mxu0 %v943
    %966 = vmatprep.subr.bf16.mxu0 0
    %967 = vmatpush1.bf16.msra.mxu0 %v944
    %968 = vmatprep.subr.bf16.mxu0 0
    %969 = vmatpush1.bf16.msra.mxu0 %v945
    %970 = vmatprep.subr.bf16.mxu0 0
    %971 = vmatpush1.bf16.msra.mxu0 0
    %972 = vmatprep.subr.bf16.mxu0 0
    %973 = vmatpush1.bf16.msra.mxu0 0
    %974 = vmatprep.subr.bf16.mxu0 0
    %975 = vmatpush1.bf16.msra.mxu0 0
    %976 = vmatprep.subr.bf16.mxu0 0
    %977 = vmatpush1.bf16.msra.mxu0 0
    %978 = vmatprep.subr.bf16.mxu0 0
    %979 = vmatpush1.bf16.msra.mxu0 0
    %980 = vmatprep.subr.bf16.mxu0 0
    %981 = vmatpush1.bf16.msra.mxu0 0
    %982 = vmatprep.subr.bf16.mxu0 0
    %983 = vmatpush1.bf16.msra.mxu0 0
    %984 = vmatprep.subr.bf16.mxu0 0
    %985 = vmatpush1.bf16.msra.mxu0 0
    %986 = vmatprep.mubr.bf16.mxu0 0
    %987 = vmatmul.mubr.bf16.gmra.mrb[0].mxu0 %v882
    %v988 = vpop.f32.mrb[0].mxu0
    %v989 = vadd.f32 %v904, %v988
    %v990 = vpop.f32.mrb[0].mxu0
    %v991 = vpop.f32.mrb[0].mxu0
    %v992 = vpop.f32.mrb[0].mxu0
    %993 = vdwg.mxu0
    %994 = vmax.xlane.f32.xlu0 %v989
    %v995 = vpop.xlane.xlu0 %994
    %v996 = vsub.f32 %v989, %v995
    %v997 = vmul.f32 %v996, 1.442695
    %v998 = vpow.pop %v997
    %999 = vadd.xlane.f32.xlu0 %v998
    %v1000 = vpop.xlane.xlu0 %999
    %v1001 = vrcp.pop %v1000
    %v1002 = vmul.f32 %v998, %v1001
    %1003 = vst [vmem:[#allocation17] sm:$0xff] %v1002
    // Predicated region
    $region98: #{tpu_custom_call.1} parent=1 // pred_check
      _
    $region99: #{tpu_custom_call.1} parent=1 // pred_check_branch
      %1005 = sbr.rel (0) target = $region101
    $region100: #{tpu_custom_call.1} parent=1 // pred_region
      %s1007 = ssub.s32 128, 128
      %1008 = vsyncadd [#allocation4], %s1007
      %s1010 = sshll.u32 [#allocation17], 4
      %s1011 = int_to_ptr.vmem [resolvable:$true] %s1010
      %1013 = dma.vmem_to_hbm [thread:$0]  %s1011, 128, %s15, [#allocation4]
    $region101: #{tpu_custom_call.1} parent=1 // pred_fallthru
      _
    // Predicated region
    $region102: #{tpu_custom_call.1} parent=1 // pred_check
      _
    $region103: #{tpu_custom_call.1} parent=1 // pred_check_branch
      %1015 = sbr.rel (0) target = $region105
    $region104: #{tpu_custom_call.1} parent=1 // pred_region
      %1016 = dma.done [#allocation4], 128
    $region105: #{tpu_custom_call.1} parent=1 // pred_fallthru
      _
    %1017 = vsyncpa [#allocation3], 1
    %1018 = vsyncpa [#allocation6], 1
    %1019 = vsyncpa [#allocation9], 1
    %1020 = vsyncpa [#allocation12], 1
    %1021 = vsyncpa [#allocation15], 1
    %1022 = vsyncpa [#allocation4], 1

</llo_original>
